<compile_context>
chip_gen: v7x
topology: tpu7x:2x2x1
jax: 0.10.0
libtpu: 0.0.40
codegen_flags: <defaults>
</compile_context>

<pallas_src>
import jax
import jax.numpy as jnp
from jax.experimental import pallas as pl
from jax.experimental.pallas import tpu as pltpu


def _leaky(v):
    # LeakyReLU(negative_slope=0.1): max(v, 0.1*v) == where(v>=0, v, 0.1*v)
    return jnp.maximum(v, 0.1 * v)


def mlp_two_head_kernel(
    x_ref,
    w1_ref, b1_ref,          # trunk layer 1
    w2_ref, b2_ref,          # trunk layer 2
    wh1_ref, bh1_ref,        # fused head layer 1:  (trunk_out, 64) = [wr1 | wf1]
    wh2_ref, bh2_ref,        # fused head layer 2:  (64, 2) block-diag of wr2/wf2
    out_ref,                 # (T, 2): col 0 = range, col 1 = failure
):
    x = x_ref[...]

    # Shared trunk
    h = _leaky(jnp.dot(x, w1_ref[...], preferred_element_type=jnp.float32)
               + b1_ref[...])
    h = _leaky(jnp.dot(h, w2_ref[...], preferred_element_type=jnp.float32)
               + b2_ref[...])

    # Fused heads: one matmul for both heads' 32-wide hidden layers ...
    g = _leaky(jnp.dot(h, wh1_ref[...], preferred_element_type=jnp.float32)
               + bh1_ref[...])
    # ... and one block-diagonal matmul producing (range, failure) side by side.
    out_ref[...] = (jnp.dot(g, wh2_ref[...], preferred_element_type=jnp.float32)
                    + bh2_ref[...])


def _fuse_head_params(params):
    """Pack the two heads into a single matmul chain."""
    wh1 = jnp.concatenate([params["wr1"], params["wf1"]], axis=1)   # (32, 64)
    bh1 = jnp.concatenate([params["br1"], params["bf1"]], axis=1)   # (1, 64)
    z = jnp.zeros_like(params["wr2"])                               # (32, 1)
    wh2 = jnp.concatenate(
        [jnp.concatenate([params["wr2"], z], axis=1),
         jnp.concatenate([z, params["wf2"]], axis=1)], axis=0)      # (64, 2)
    bh2 = jnp.concatenate([params["br2"], params["bf2"]], axis=1)   # (1, 2)
    return wh1, bh1, wh2, bh2


def multi_head_formation_forward(x, params, *, batch_tile=None):
    """Run the two-headed MLP forward pass with one fused Pallas kernel.

    x: [B, input_size] float32
    params: dict of weights/biases (weights as [in, out], biases as [1, out])
    Returns: (range_output [B, 1], failure_output [B, 1])
    """
    B, F = x.shape

    # --- choose batch tile: single invocation for small B, 512-row tiles else.
    def _round_up(n, m):
        return -(-n // m) * m

    if batch_tile is None:
        b8 = _round_up(B, 8)
        if b8 <= 1024:
            tile = b8
        else:
            tile = 512
    else:
        tile = _round_up(batch_tile, 8)
    b_pad = _round_up(B, tile)

    if b_pad != B:
        x = jnp.pad(x, ((0, b_pad - B), (0, 0)))

    grid = (b_pad // tile,)

    wh1, bh1, wh2, bh2 = _fuse_head_params(params)
    ordered = [
        params["w1"], params["b1"],
        params["w2"], params["b2"],
        wh1, bh1, wh2, bh2,
    ]

    def batch_spec(last_dim):
        return pl.BlockSpec((tile, last_dim), lambda i: (i, 0))

    def weight_spec(arr):
        return pl.BlockSpec(arr.shape, lambda i: (0, 0))

    in_specs = [batch_spec(F)] + [weight_spec(a) for a in ordered]
    out_specs = batch_spec(2)
    out_shape = jax.ShapeDtypeStruct((b_pad, 2), jnp.float32)

    out = pl.pallas_call(
        mlp_two_head_kernel,
        grid=grid,
        in_specs=in_specs,
        out_specs=out_specs,
        out_shape=out_shape,
        compiler_params=pltpu.CompilerParams(
            dimension_semantics=("parallel",)),
    )(x, *ordered)

    out = out[:B]
    return out[:, 0:1], out[:, 1:2]


def init_params(key, input_size, hidden_sizes):
    """Deterministic synthetic parameter init (Kaiming-uniform-like scale)."""
    params = {}
    sizes = [input_size] + list(hidden_sizes)

    def linear(key, fan_in, fan_out):
        kw, kb = jax.random.split(key)
        bound = 1.0 / jnp.sqrt(fan_in)
        w = jax.random.uniform(kw, (fan_in, fan_out), jnp.float32, -bound, bound)
        b = jax.random.uniform(kb, (1, fan_out), jnp.float32, -bound, bound)
        return w, b

    keys = jax.random.split(key, 6)
    # Trunk (exactly two hidden layers for this kernel instance)
    params["w1"], params["b1"] = linear(keys[0], sizes[0], sizes[1])
    params["w2"], params["b2"] = linear(keys[1], sizes[1], sizes[2])
    # Range head
    params["wr1"], params["br1"] = linear(keys[2], sizes[2], 32)
    params["wr2"], params["br2"] = linear(keys[3], 32, 1)
    # Failure head
    params["wf1"], params["bf1"] = linear(keys[4], sizes[2], 32)
    params["wf2"], params["bf2"] = linear(keys[5], 32, 1)
    return params


def reference_forward(x, p):
    def leaky(v):
        return jnp.where(v >= 0, v, 0.1 * v)
    h = leaky(x @ p["w1"] + p["b1"])
    h = leaky(h @ p["w2"] + p["b2"])
    r = leaky(h @ p["wr1"] + p["br1"]) @ p["wr2"] + p["br2"]
    f = leaky(h @ p["wf1"] + p["bf1"]) @ p["wf2"] + p["bf2"]
    return r, f


if __name__ == "__main__":
    input_size = 16
    hidden_sizes = [64, 32]
    batch = 16

    key = jax.random.PRNGKey(0)
    kx, kp = jax.random.split(key)
    x = jax.random.normal(kx, (batch, input_size), dtype=jnp.float32)
    params = init_params(kp, input_size, hidden_sizes)

    range_out, fail_out = multi_head_formation_forward(x, params)
    range_out, fail_out = jax.block_until_ready((range_out, fail_out))

    # Sanity check against a pure-JAX reference of the same math.
    r_ref, f_ref = reference_forward(x, params)
    assert range_out.shape == (batch, 1) and fail_out.shape == (batch, 1)
    assert jnp.allclose(range_out, r_ref, atol=1e-5, rtol=1e-5)
    assert jnp.allclose(fail_out, f_ref, atol=1e-5, rtol=1e-5)

    # TODO(synk): for large-batch inference on v6e/v7x, cast x and weights to
    # bfloat16 at the call boundary (keep f32 accumulation) for ~2x MXU rate.

    print("KERNEL_OK")
</pallas_src>

<mosaic_0001>
module attributes {stable_mosaic.version = 11 : i64} {
  func.func @mlp_two_head_kernel(%arg0: i32, %arg1: memref<16x16xf32, #tpu.memory_space<vmem>>, %arg2: memref<16x64xf32, #tpu.memory_space<vmem>>, %arg3: memref<1x64xf32, #tpu.memory_space<vmem>>, %arg4: memref<64x32xf32, #tpu.memory_space<vmem>>, %arg5: memref<1x32xf32, #tpu.memory_space<vmem>>, %arg6: memref<32x64xf32, #tpu.memory_space<vmem>>, %arg7: memref<1x64xf32, #tpu.memory_space<vmem>>, %arg8: memref<64x2xf32, #tpu.memory_space<vmem>>, %arg9: memref<1x2xf32, #tpu.memory_space<vmem>>, %arg10: memref<16x2xf32, #tpu.memory_space<vmem>>) attributes {dimension_semantics = [#tpu.dimension_semantics<parallel>], iteration_bounds = array<i64: 1>, scalar_prefetch = 0 : i64, scratch_operands = 0 : i64, tpu.core_type = #tpu.core_type<tc>, window_params = [{transform_indices = @transform_0, window_bounds = array<i64: 16, 16>}, {pipeline_mode = #tpu.pipeline_mode<synchronous>, transform_indices = @transform_1, window_bounds = array<i64: 16, 64>}, {pipeline_mode = #tpu.pipeline_mode<synchronous>, transform_indices = @transform_2, window_bounds = array<i64: 1, 64>}, {pipeline_mode = #tpu.pipeline_mode<synchronous>, transform_indices = @transform_3, window_bounds = array<i64: 64, 32>}, {pipeline_mode = #tpu.pipeline_mode<synchronous>, transform_indices = @transform_4, window_bounds = array<i64: 1, 32>}, {pipeline_mode = #tpu.pipeline_mode<synchronous>, transform_indices = @transform_5, window_bounds = array<i64: 32, 64>}, {pipeline_mode = #tpu.pipeline_mode<synchronous>, transform_indices = @transform_6, window_bounds = array<i64: 1, 64>}, {pipeline_mode = #tpu.pipeline_mode<synchronous>, transform_indices = @transform_7, window_bounds = array<i64: 64, 2>}, {pipeline_mode = #tpu.pipeline_mode<synchronous>, transform_indices = @transform_8, window_bounds = array<i64: 1, 2>}, {transform_indices = @transform_9, window_bounds = array<i64: 16, 2>}]} {
    %c0 = arith.constant 0 : index
    %c0_0 = arith.constant 0 : index
    %0 = vector.load %arg1[%c0, %c0_0] : memref<16x16xf32, #tpu.memory_space<vmem>>, vector<16x16xf32>
    %c0_1 = arith.constant 0 : index
    %c0_2 = arith.constant 0 : index
    %1 = vector.load %arg2[%c0_1, %c0_2] : memref<16x64xf32, #tpu.memory_space<vmem>>, vector<16x64xf32>
    %cst = arith.constant dense<0.000000e+00> : vector<16x64xf32>
    %2 = tpu.matmul %0, %1, %cst {dimension_numbers = #tpu.dot_dimension_numbers<[1], [0], [0], [1], [0, 0, 1, 1], [], []>} : vector<16x16xf32>, vector<16x64xf32>, vector<16x64xf32> -> vector<16x64xf32>
    %c0_3 = arith.constant 0 : index
    %c0_4 = arith.constant 0 : index
    %3 = vector.load %arg3[%c0_3, %c0_4] : memref<1x64xf32, #tpu.memory_space<vmem>>, vector<1x64xf32>
    %4 = vector.broadcast %3 : vector<1x64xf32> to vector<16x64xf32>
    %5 = arith.addf %2, %4 : vector<16x64xf32>
    %cst_5 = arith.constant 1.000000e-01 : f32
    %6 = vector.broadcast %cst_5 : f32 to vector<16x64xf32>
    %7 = arith.mulf %6, %5 : vector<16x64xf32>
    %8 = arith.maximumf %5, %7 : vector<16x64xf32>
    %c0_6 = arith.constant 0 : index
    %c0_7 = arith.constant 0 : index
    %9 = vector.load %arg4[%c0_6, %c0_7] : memref<64x32xf32, #tpu.memory_space<vmem>>, vector<64x32xf32>
    %cst_8 = arith.constant dense<0.000000e+00> : vector<16x32xf32>
    %10 = tpu.matmul %8, %9, %cst_8 {dimension_numbers = #tpu.dot_dimension_numbers<[1], [0], [0], [1], [0, 0, 1, 1], [], []>} : vector<16x64xf32>, vector<64x32xf32>, vector<16x32xf32> -> vector<16x32xf32>
    %c0_9 = arith.constant 0 : index
    %c0_10 = arith.constant 0 : index
    %11 = vector.load %arg5[%c0_9, %c0_10] : memref<1x32xf32, #tpu.memory_space<vmem>>, vector<1x32xf32>
    %12 = vector.broadcast %11 : vector<1x32xf32> to vector<16x32xf32>
    %13 = arith.addf %10, %12 : vector<16x32xf32>
    %cst_11 = arith.constant 1.000000e-01 : f32
    %14 = vector.broadcast %cst_11 : f32 to vector<16x32xf32>
    %15 = arith.mulf %14, %13 : vector<16x32xf32>
    %16 = arith.maximumf %13, %15 : vector<16x32xf32>
    %c0_12 = arith.constant 0 : index
    %c0_13 = arith.constant 0 : index
    %17 = vector.load %arg6[%c0_12, %c0_13] : memref<32x64xf32, #tpu.memory_space<vmem>>, vector<32x64xf32>
    %cst_14 = arith.constant dense<0.000000e+00> : vector<16x64xf32>
    %18 = tpu.matmul %16, %17, %cst_14 {dimension_numbers = #tpu.dot_dimension_numbers<[1], [0], [0], [1], [0, 0, 1, 1], [], []>} : vector<16x32xf32>, vector<32x64xf32>, vector<16x64xf32> -> vector<16x64xf32>
    %c0_15 = arith.constant 0 : index
    %c0_16 = arith.constant 0 : index
    %19 = vector.load %arg7[%c0_15, %c0_16] : memref<1x64xf32, #tpu.memory_space<vmem>>, vector<1x64xf32>
    %20 = vector.broadcast %19 : vector<1x64xf32> to vector<16x64xf32>
    %21 = arith.addf %18, %20 : vector<16x64xf32>
    %cst_17 = arith.constant 1.000000e-01 : f32
    %22 = vector.broadcast %cst_17 : f32 to vector<16x64xf32>
    %23 = arith.mulf %22, %21 : vector<16x64xf32>
    %24 = arith.maximumf %21, %23 : vector<16x64xf32>
    %c0_18 = arith.constant 0 : index
    %c0_19 = arith.constant 0 : index
    %25 = vector.load %arg8[%c0_18, %c0_19] : memref<64x2xf32, #tpu.memory_space<vmem>>, vector<64x2xf32>
    %cst_20 = arith.constant dense<0.000000e+00> : vector<16x2xf32>
    %26 = tpu.matmul %24, %25, %cst_20 {dimension_numbers = #tpu.dot_dimension_numbers<[1], [0], [0], [1], [0, 0, 1, 1], [], []>} : vector<16x64xf32>, vector<64x2xf32>, vector<16x2xf32> -> vector<16x2xf32>
    %c0_21 = arith.constant 0 : index
    %c0_22 = arith.constant 0 : index
    %27 = vector.load %arg9[%c0_21, %c0_22] : memref<1x2xf32, #tpu.memory_space<vmem>>, vector<1x2xf32>
    %28 = vector.broadcast %27 : vector<1x2xf32> to vector<16x2xf32>
    %29 = arith.addf %26, %28 : vector<16x2xf32>
    %c0_23 = arith.constant 0 : index
    %c0_24 = arith.constant 0 : index
    %30 = vector.load %arg10[%c0_23, %c0_24] : memref<16x2xf32, #tpu.memory_space<vmem>>, vector<16x2xf32>
    tpu.vector_store %arg10[%c0_23, %c0_24], %29 {strides = array<i32>} : memref<16x2xf32, #tpu.memory_space<vmem>>, vector<16x2xf32>,
    return
  }
  func.func @transform_0(%arg0: i32) -> (i32, i32) {
    %c0_i32 = arith.constant 0 : i32
    %c0_i32_0 = arith.constant 0 : i32
    return %arg0, %c0_i32 : i32, i32
  }
  func.func @transform_1(%arg0: i32) -> (i32, i32) {
    %c0_i32 = arith.constant 0 : i32
    %c0_i32_0 = arith.constant 0 : i32
    %c0_i32_1 = arith.constant 0 : i32
    return %c0_i32, %c0_i32_0 : i32, i32
  }
  func.func @transform_2(%arg0: i32) -> (i32, i32) {
    %c0_i32 = arith.constant 0 : i32
    %c0_i32_0 = arith.constant 0 : i32
    %c0_i32_1 = arith.constant 0 : i32
    return %c0_i32, %c0_i32_0 : i32, i32
  }
  func.func @transform_3(%arg0: i32) -> (i32, i32) {
    %c0_i32 = arith.constant 0 : i32
    %c0_i32_0 = arith.constant 0 : i32
    %c0_i32_1 = arith.constant 0 : i32
    return %c0_i32, %c0_i32_0 : i32, i32
  }
  func.func @transform_4(%arg0: i32) -> (i32, i32) {
    %c0_i32 = arith.constant 0 : i32
    %c0_i32_0 = arith.constant 0 : i32
    %c0_i32_1 = arith.constant 0 : i32
    return %c0_i32, %c0_i32_0 : i32, i32
  }
  func.func @transform_5(%arg0: i32) -> (i32, i32) {
    %c0_i32 = arith.constant 0 : i32
    %c0_i32_0 = arith.constant 0 : i32
    %c0_i32_1 = arith.constant 0 : i32
    return %c0_i32, %c0_i32_0 : i32, i32
  }
  func.func @transform_6(%arg0: i32) -> (i32, i32) {
    %c0_i32 = arith.constant 0 : i32
    %c0_i32_0 = arith.constant 0 : i32
    %c0_i32_1 = arith.constant 0 : i32
    return %c0_i32, %c0_i32_0 : i32, i32
  }
  func.func @transform_7(%arg0: i32) -> (i32, i32) {
    %c0_i32 = arith.constant 0 : i32
    %c0_i32_0 = arith.constant 0 : i32
    %c0_i32_1 = arith.constant 0 : i32
    return %c0_i32, %c0_i32_0 : i32, i32
  }
  func.func @transform_8(%arg0: i32) -> (i32, i32) {
    %c0_i32 = arith.constant 0 : i32
    %c0_i32_0 = arith.constant 0 : i32
    %c0_i32_1 = arith.constant 0 : i32
    return %c0_i32, %c0_i32_0 : i32, i32
  }
  func.func @transform_9(%arg0: i32) -> (i32, i32) {
    %c0_i32 = arith.constant 0 : i32
    %c0_i32_0 = arith.constant 0 : i32
    return %arg0, %c0_i32 : i32, i32
  }
}

</mosaic_0001>

<llo_original>
// kernel: tpu_custom_call.1
$region0: #{tpu_custom_call.1}
  #allocation0 [shape = 'u32[]', space=smem, size = 0x4, offset = 0x4, fixed_abs, tag = 'smem constant byte address 0x4 - core index']
  #allocation1 [shape = 'u32[144,128]{1,0:T(1,128)}', space=vmem, size = 0x12000, scoped, tag = 'internal scratch']
  %s0 = inlined_call_operand.vmem [shape: f32[16,16], index: 0, kind: input, shape index: {}]
  %s1 = inlined_call_operand.vmem [shape: f32[16,64], index: 1, kind: input, shape index: {}]
  %s2 = inlined_call_operand.vmem [shape: f32[1,64], index: 2, kind: input, shape index: {}]
  %s3 = inlined_call_operand.vmem [shape: f32[64,32], index: 3, kind: input, shape index: {}]
  %s4 = inlined_call_operand.vmem [shape: f32[1,32], index: 4, kind: input, shape index: {}]
  %s5 = inlined_call_operand.vmem [shape: f32[32,64], index: 5, kind: input, shape index: {}]
  %s6 = inlined_call_operand.vmem [shape: f32[1,64], index: 6, kind: input, shape index: {}]
  %s7 = inlined_call_operand.vmem [shape: f32[64,2], index: 7, kind: input, shape index: {}]
  %s8 = inlined_call_operand.vmem [shape: f32[1,2], index: 8, kind: input, shape index: {}]
  %s9 = inlined_call_operand.vmem [shape: f32[16,2], index: 9, kind: output, shape index: {}]
  %s10 = sld [smem:[#allocation0]]
  $region46: #{tpu_custom_call.1} parent=0
    _
  %s12 = ssub.s32 1, %s10
  %s13 = scalar_select 0, %s12, %s10
  // Predicated region
  $region2: #{tpu_custom_call.1} parent=0 // pred_check
    _
  $region3: #{tpu_custom_call.1} parent=0 // pred_check_branch
    %15 = sbr.rel (0) target = $region5
  $region4: #{tpu_custom_call.1} parent=0 // pred_region
    _
  $region5: #{tpu_custom_call.1} parent=0 // pred_fallthru
    _
  // Predicated region
  $region6: #{tpu_custom_call.1} parent=0 // pred_check
    _
  $region7: #{tpu_custom_call.1} parent=0 // pred_check_branch
    %17 = sbr.rel (0) target = $region9
  $region8: #{tpu_custom_call.1} parent=0 // pred_region
    _
  $region9: #{tpu_custom_call.1} parent=0 // pred_fallthru
    _
  // Predicated region
  $region10: #{tpu_custom_call.1} parent=0 // pred_check
    _
  $region11: #{tpu_custom_call.1} parent=0 // pred_check_branch
    %19 = sbr.rel (0) target = $region13
  $region12: #{tpu_custom_call.1} parent=0 // pred_region
    _
  $region13: #{tpu_custom_call.1} parent=0 // pred_fallthru
    _
  // Predicated region
  $region14: #{tpu_custom_call.1} parent=0 // pred_check
    _
  $region15: #{tpu_custom_call.1} parent=0 // pred_check_branch
    %21 = sbr.rel (0) target = $region17
  $region16: #{tpu_custom_call.1} parent=0 // pred_region
    _
  $region17: #{tpu_custom_call.1} parent=0 // pred_fallthru
    _
  // Predicated region
  $region18: #{tpu_custom_call.1} parent=0 // pred_check
    _
  $region19: #{tpu_custom_call.1} parent=0 // pred_check_branch
    %23 = sbr.rel (0) target = $region21
  $region20: #{tpu_custom_call.1} parent=0 // pred_region
    _
  $region21: #{tpu_custom_call.1} parent=0 // pred_fallthru
    _
  // Predicated region
  $region22: #{tpu_custom_call.1} parent=0 // pred_check
    _
  $region23: #{tpu_custom_call.1} parent=0 // pred_check_branch
    %25 = sbr.rel (0) target = $region25
  $region24: #{tpu_custom_call.1} parent=0 // pred_region
    _
  $region25: #{tpu_custom_call.1} parent=0 // pred_fallthru
    _
  // Predicated region
  $region26: #{tpu_custom_call.1} parent=0 // pred_check
    _
  $region27: #{tpu_custom_call.1} parent=0 // pred_check_branch
    %27 = sbr.rel (0) target = $region29
  $region28: #{tpu_custom_call.1} parent=0 // pred_region
    _
  $region29: #{tpu_custom_call.1} parent=0 // pred_fallthru
    _
  // Predicated region
  $region30: #{tpu_custom_call.1} parent=0 // pred_check
    _
  $region31: #{tpu_custom_call.1} parent=0 // pred_check_branch
    %29 = sbr.rel (0) target = $region33
  $region32: #{tpu_custom_call.1} parent=0 // pred_region
    _
  $region33: #{tpu_custom_call.1} parent=0 // pred_fallthru
    _
  // Predicated region
  $region34: #{tpu_custom_call.1} parent=0 // pred_check
    _
  $region35: #{tpu_custom_call.1} parent=0 // pred_check_branch
    %31 = sbr.rel (0) target = $region37
  $region36: #{tpu_custom_call.1} parent=0 // pred_region
    _
  $region37: #{tpu_custom_call.1} parent=0 // pred_fallthru
    _
  %v32 = vld [vmem:[%s0] sm:$0xff]
  %v33 = vld [vmem:[%s0 + $0x8] sm:$0xff]
  %v34 = vld [vmem:[%s1] sm:$0xff]
  %v35 = vld [vmem:[%s1 + $0x8] sm:$0xff]
  %v36 = vld [vmem:[%s2] sm:$0x1]
  %v38 = vlaneseq
  %v39 = vshrl.u32 %v38, 7
  %v40 = vsub.s32 0, %v39
  %v41 = vrot.slane %v36, %v40
  %vm43 = vcmask 130048
  %v45 = vsel %vm43, %v32, 0
  %v48 = vsel %vm43, %v33, 0
  %50 = vmatprep.subr.mxu0 0.0
  %51 = vmatpush1.msra.mxu0 %v34
  %52 = vmatprep.subr.mxu0 0.0
  %53 = vmatpush1.msra.mxu0 %v35
  %54 = vmatprep.subr.mxu0 0.0
  %55 = vmatpush1.msra.mxu0 0.0
  %56 = vmatprep.subr.mxu0 0.0
  %57 = vmatpush1.msra.mxu0 0.0
  %58 = vmatprep.subr.mxu0 0.0
  %59 = vmatpush1.msra.mxu0 0.0
  %60 = vmatprep.subr.mxu0 0.0
  %61 = vmatpush1.msra.mxu0 0.0
  %62 = vmatprep.subr.mxu0 0.0
  %63 = vmatpush1.msra.mxu0 0.0
  %64 = vmatprep.subr.mxu0 0.0
  %65 = vmatpush1.msra.mxu0 0.0
  %66 = vmatprep.subr.mxu0 0.0
  %67 = vmatpush1.msra.mxu0 0.0
  %68 = vmatprep.subr.mxu0 0.0
  %69 = vmatpush1.msra.mxu0 0.0
  %70 = vmatprep.subr.mxu0 0.0
  %71 = vmatpush1.msra.mxu0 0.0
  %72 = vmatprep.subr.mxu0 0.0
  %73 = vmatpush1.msra.mxu0 0.0
  %74 = vmatprep.subr.mxu0 0.0
  %75 = vmatpush1.msra.mxu0 0.0
  %76 = vmatprep.subr.mxu0 0.0
  %77 = vmatpush1.msra.mxu0 0.0
  %78 = vmatprep.subr.mxu0 0.0
  %79 = vmatpush1.msra.mxu0 0.0
  %80 = vmatprep.subr.mxu0 0.0
  %81 = vmatpush1.msra.mxu0 0.0
  %82 = vmatprep.subr.mxu0 0.0
  %83 = vmatpush1.msra.mxu0 0.0
  %84 = vmatprep.subr.mxu0 0.0
  %85 = vmatpush1.msra.mxu0 0.0
  %86 = vmatprep.subr.mxu0 0.0
  %87 = vmatpush1.msra.mxu0 0.0
  %88 = vmatprep.subr.mxu0 0.0
  %89 = vmatpush1.msra.mxu0 0.0
  %90 = vmatprep.subr.mxu0 0.0
  %91 = vmatpush1.msra.mxu0 0.0
  %92 = vmatprep.subr.mxu0 0.0
  %93 = vmatpush1.msra.mxu0 0.0
  %94 = vmatprep.subr.mxu0 0.0
  %95 = vmatpush1.msra.mxu0 0.0
  %96 = vmatprep.subr.mxu0 0.0
  %97 = vmatpush1.msra.mxu0 0.0
  %98 = vmatprep.subr.mxu0 0.0
  %99 = vmatpush1.msra.mxu0 0.0
  %100 = vmatprep.subr.mxu0 0.0
  %101 = vmatpush1.msra.mxu0 0.0
  %102 = vmatprep.subr.mxu0 0.0
  %103 = vmatpush1.msra.mxu0 0.0
  %104 = vmatprep.subr.mxu0 0.0
  %105 = vmatpush1.msra.mxu0 0.0
  %106 = vmatprep.subr.mxu0 0.0
  %107 = vmatpush1.msra.mxu0 0.0
  %108 = vmatprep.subr.mxu0 0.0
  %109 = vmatpush1.msra.mxu0 0.0
  %110 = vmatprep.subr.mxu0 0.0
  %111 = vmatpush1.msra.mxu0 0.0
  %112 = vmatprep.subr.mxu0 0.0
  %113 = vmatpush1.msra.mxu0 0.0
  %114 = vmatprep.mubr.f32.mxu0 0.0
  %115 = vmatmul.mubr.f32.gmra.mrb[0].mxu0 %v45
  %v116 = vpop.f32.mrb[0].mxu0
  %v117 = vadd.f32 %v41, %v116
  %v118 = vpop.f32.mrb[0].mxu0
  %119 = vmatprep.mubr.f32.mxu0 0.0
  %120 = vmatmul.mubr.f32.gmra.mrb[0].mxu0 %v48
  %v121 = vpop.f32.mrb[0].mxu0
  %v122 = vadd.f32 %v41, %v121
  %v123 = vpop.f32.mrb[0].mxu0
  %124 = vdwg.mxu0
  %v125 = vmul.f32 %v117, 0.1
  %v126 = vmul.f32 %v122, 0.1
  %v127 = vmax.f32 %v117, %v125
  %v128 = vmax.f32 %v122, %v126
  %v129 = vld [vmem:[%s3] sm:$0xff]
  %v130 = vld [vmem:[%s3 + $0x8] sm:$0xff]
  %v131 = vld [vmem:[%s3 + $0x10] sm:$0xff]
  %v132 = vld [vmem:[%s3 + $0x18] sm:$0xff]
  %v133 = vld [vmem:[%s3 + $0x20] sm:$0xff]
  %v134 = vld [vmem:[%s3 + $0x28] sm:$0xff]
  %v135 = vld [vmem:[%s3 + $0x30] sm:$0xff]
  %v136 = vld [vmem:[%s3 + $0x38] sm:$0xff]
  %v137 = vld [vmem:[%s4] sm:$0x1]
  %v139 = vlaneseq
  %v140 = vshrl.u32 %v139, 7
  %v141 = vsub.s32 0, %v140
  %v142 = vrot.slane %v137, %v141
  %vm144 = vcmask 523264
  %v146 = vsel %vm144, %v127, 0
  %v149 = vsel %vm144, %v128, 0
  %151 = vmatprep.subr.mxu0 0.0
  %152 = vmatpush1.msra.mxu0 %v129
  %153 = vmatprep.subr.mxu0 0.0
  %154 = vmatpush1.msra.mxu0 %v130
  %155 = vmatprep.subr.mxu0 0.0
  %156 = vmatpush1.msra.mxu0 %v131
  %157 = vmatprep.subr.mxu0 0.0
  %158 = vmatpush1.msra.mxu0 %v132
  %159 = vmatprep.subr.mxu0 0.0
  %160 = vmatpush1.msra.mxu0 %v133
  %161 = vmatprep.subr.mxu0 0.0
  %162 = vmatpush1.msra.mxu0 %v134
  %163 = vmatprep.subr.mxu0 0.0
  %164 = vmatpush1.msra.mxu0 %v135
  %165 = vmatprep.subr.mxu0 0.0
  %166 = vmatpush1.msra.mxu0 %v136
  %167 = vmatprep.subr.mxu0 0.0
  %168 = vmatpush1.msra.mxu0 0.0
  %169 = vmatprep.subr.mxu0 0.0
  %170 = vmatpush1.msra.mxu0 0.0
  %171 = vmatprep.subr.mxu0 0.0
  %172 = vmatpush1.msra.mxu0 0.0
  %173 = vmatprep.subr.mxu0 0.0
  %174 = vmatpush1.msra.mxu0 0.0
  %175 = vmatprep.subr.mxu0 0.0
  %176 = vmatpush1.msra.mxu0 0.0
  %177 = vmatprep.subr.mxu0 0.0
  %178 = vmatpush1.msra.mxu0 0.0
  %179 = vmatprep.subr.mxu0 0.0
  %180 = vmatpush1.msra.mxu0 0.0
  %181 = vmatprep.subr.mxu0 0.0
  %182 = vmatpush1.msra.mxu0 0.0
  %183 = vmatprep.subr.mxu0 0.0
  %184 = vmatpush1.msra.mxu0 0.0
  %185 = vmatprep.subr.mxu0 0.0
  %186 = vmatpush1.msra.mxu0 0.0
  %187 = vmatprep.subr.mxu0 0.0
  %188 = vmatpush1.msra.mxu0 0.0
  %189 = vmatprep.subr.mxu0 0.0
  %190 = vmatpush1.msra.mxu0 0.0
  %191 = vmatprep.subr.mxu0 0.0
  %192 = vmatpush1.msra.mxu0 0.0
  %193 = vmatprep.subr.mxu0 0.0
  %194 = vmatpush1.msra.mxu0 0.0
  %195 = vmatprep.subr.mxu0 0.0
  %196 = vmatpush1.msra.mxu0 0.0
  %197 = vmatprep.subr.mxu0 0.0
  %198 = vmatpush1.msra.mxu0 0.0
  %199 = vmatprep.subr.mxu0 0.0
  %200 = vmatpush1.msra.mxu0 0.0
  %201 = vmatprep.subr.mxu0 0.0
  %202 = vmatpush1.msra.mxu0 0.0
  %203 = vmatprep.subr.mxu0 0.0
  %204 = vmatpush1.msra.mxu0 0.0
  %205 = vmatprep.subr.mxu0 0.0
  %206 = vmatpush1.msra.mxu0 0.0
  %207 = vmatprep.subr.mxu0 0.0
  %208 = vmatpush1.msra.mxu0 0.0
  %209 = vmatprep.subr.mxu0 0.0
  %210 = vmatpush1.msra.mxu0 0.0
  %211 = vmatprep.subr.mxu0 0.0
  %212 = vmatpush1.msra.mxu0 0.0
  %213 = vmatprep.subr.mxu0 0.0
  %214 = vmatpush1.msra.mxu0 0.0
  %215 = vmatprep.mubr.f32.mxu0 0.0
  %216 = vmatmul.mubr.f32.gmra.mrb[0].mxu0 %v146
  %v217 = vpop.f32.mrb[0].mxu0
  %v218 = vadd.f32 %v142, %v217
  %v219 = vpop.f32.mrb[0].mxu0
  %220 = vmatprep.mubr.f32.mxu0 0.0
  %221 = vmatmul.mubr.f32.gmra.mrb[0].mxu0 %v149
  %v222 = vpop.f32.mrb[0].mxu0
  %v223 = vadd.f32 %v142, %v222
  %v224 = vpop.f32.mrb[0].mxu0
  %225 = vdwg.mxu0
  %v226 = vmul.f32 %v218, 0.1
  %v227 = vmul.f32 %v223, 0.1
  %v228 = vmax.f32 %v218, %v226
  %v229 = vmax.f32 %v223, %v227
  %v230 = vld [vmem:[%s5] sm:$0xff]
  %v231 = vld [vmem:[%s5 + $0x8] sm:$0xff]
  %v232 = vld [vmem:[%s5 + $0x10] sm:$0xff]
  %v233 = vld [vmem:[%s5 + $0x18] sm:$0xff]
  %v234 = vld [vmem:[%s6] sm:$0x1]
  %v236 = vlaneseq
  %v237 = vshrl.u32 %v236, 7
  %v238 = vsub.s32 0, %v237
  %v239 = vrot.slane %v234, %v238
  %vm241 = vcmask 261120
  %v243 = vsel %vm241, %v228, 0
  %v246 = vsel %vm241, %v229, 0
  %248 = vmatprep.subr.mxu0 0.0
  %249 = vmatpush1.msra.mxu0 %v230
  %250 = vmatprep.subr.mxu0 0.0
  %251 = vmatpush1.msra.mxu0 %v231
  %252 = vmatprep.subr.mxu0 0.0
  %253 = vmatpush1.msra.mxu0 %v232
  %254 = vmatprep.subr.mxu0 0.0
  %255 = vmatpush1.msra.mxu0 %v233
  %256 = vmatprep.subr.mxu0 0.0
  %257 = vmatpush1.msra.mxu0 0.0
  %258 = vmatprep.subr.mxu0 0.0
  %259 = vmatpush1.msra.mxu0 0.0
  %260 = vmatprep.subr.mxu0 0.0
  %261 = vmatpush1.msra.mxu0 0.0
  %262 = vmatprep.subr.mxu0 0.0
  %263 = vmatpush1.msra.mxu0 0.0
  %264 = vmatprep.subr.mxu0 0.0
  %265 = vmatpush1.msra.mxu0 0.0
  %266 = vmatprep.subr.mxu0 0.0
  %267 = vmatpush1.msra.mxu0 0.0
  %268 = vmatprep.subr.mxu0 0.0
  %269 = vmatpush1.msra.mxu0 0.0
  %270 = vmatprep.subr.mxu0 0.0
  %271 = vmatpush1.msra.mxu0 0.0
  %272 = vmatprep.subr.mxu0 0.0
  %273 = vmatpush1.msra.mxu0 0.0
  %274 = vmatprep.subr.mxu0 0.0
  %275 = vmatpush1.msra.mxu0 0.0
  %276 = vmatprep.subr.mxu0 0.0
  %277 = vmatpush1.msra.mxu0 0.0
  %278 = vmatprep.subr.mxu0 0.0
  %279 = vmatpush1.msra.mxu0 0.0
  %280 = vmatprep.subr.mxu0 0.0
  %281 = vmatpush1.msra.mxu0 0.0
  %282 = vmatprep.subr.mxu0 0.0
  %283 = vmatpush1.msra.mxu0 0.0
  %284 = vmatprep.subr.mxu0 0.0
  %285 = vmatpush1.msra.mxu0 0.0
  %286 = vmatprep.subr.mxu0 0.0
  %287 = vmatpush1.msra.mxu0 0.0
  %288 = vmatprep.subr.mxu0 0.0
  %289 = vmatpush1.msra.mxu0 0.0
  %290 = vmatprep.subr.mxu0 0.0
  %291 = vmatpush1.msra.mxu0 0.0
  %292 = vmatprep.subr.mxu0 0.0
  %293 = vmatpush1.msra.mxu0 0.0
  %294 = vmatprep.subr.mxu0 0.0
  %295 = vmatpush1.msra.mxu0 0.0
  %296 = vmatprep.subr.mxu0 0.0
  %297 = vmatpush1.msra.mxu0 0.0
  %298 = vmatprep.subr.mxu0 0.0
  %299 = vmatpush1.msra.mxu0 0.0
  %300 = vmatprep.subr.mxu0 0.0
  %301 = vmatpush1.msra.mxu0 0.0
  %302 = vmatprep.subr.mxu0 0.0
  %303 = vmatpush1.msra.mxu0 0.0
  %304 = vmatprep.subr.mxu0 0.0
  %305 = vmatpush1.msra.mxu0 0.0
  %306 = vmatprep.subr.mxu0 0.0
  %307 = vmatpush1.msra.mxu0 0.0
  %308 = vmatprep.subr.mxu0 0.0
  %309 = vmatpush1.msra.mxu0 0.0
  %310 = vmatprep.subr.mxu0 0.0
  %311 = vmatpush1.msra.mxu0 0.0
  %312 = vmatprep.mubr.f32.mxu0 0.0
  %313 = vmatmul.mubr.f32.gmra.mrb[0].mxu0 %v243
  %v314 = vpop.f32.mrb[0].mxu0
  %v315 = vadd.f32 %v239, %v314
  %v316 = vpop.f32.mrb[0].mxu0
  %317 = vmatprep.mubr.f32.mxu0 0.0
  %318 = vmatmul.mubr.f32.gmra.mrb[0].mxu0 %v246
  %v319 = vpop.f32.mrb[0].mxu0
  %v320 = vadd.f32 %v239, %v319
  %v321 = vpop.f32.mrb[0].mxu0
  %322 = vdwg.mxu0
  %v323 = vmul.f32 %v315, 0.1
  %v324 = vmul.f32 %v320, 0.1
  %v325 = vmax.f32 %v315, %v323
  %v326 = vmax.f32 %v320, %v324
  %v327 = vld [vmem:[%s7] sm:$0xff]
  %v328 = vld [vmem:[%s7 + $0x8] sm:$0xff]
  %v329 = vld [vmem:[%s7 + $0x10] sm:$0xff]
  %v330 = vld [vmem:[%s7 + $0x18] sm:$0xff]
  %v331 = vld [vmem:[%s7 + $0x20] sm:$0xff]
  %v332 = vld [vmem:[%s7 + $0x28] sm:$0xff]
  %v333 = vld [vmem:[%s7 + $0x30] sm:$0xff]
  %v334 = vld [vmem:[%s7 + $0x38] sm:$0xff]
  %v335 = vld [vmem:[%s8] sm:$0x1]
  %v337 = vlaneseq
  %v338 = vshrl.u32 %v337, 7
  %v339 = vsub.s32 0, %v338
  %v340 = vrot.slane %v335, %v339
  %v343 = vsel %vm144, %v325, 0
  %v346 = vsel %vm144, %v326, 0
  %348 = vmatprep.subr.mxu0 0.0
  %349 = vmatpush1.msra.mxu0 %v327
  %350 = vmatprep.subr.mxu0 0.0
  %351 = vmatpush1.msra.mxu0 %v328
  %352 = vmatprep.subr.mxu0 0.0
  %353 = vmatpush1.msra.mxu0 %v329
  %354 = vmatprep.subr.mxu0 0.0
  %355 = vmatpush1.msra.mxu0 %v330
  %356 = vmatprep.subr.mxu0 0.0
  %357 = vmatpush1.msra.mxu0 %v331
  %358 = vmatprep.subr.mxu0 0.0
  %359 = vmatpush1.msra.mxu0 %v332
  %360 = vmatprep.subr.mxu0 0.0
  %361 = vmatpush1.msra.mxu0 %v333
  %362 = vmatprep.subr.mxu0 0.0
  %363 = vmatpush1.msra.mxu0 %v334
  %364 = vmatprep.subr.mxu0 0.0
  %365 = vmatpush1.msra.mxu0 0.0
  %366 = vmatprep.subr.mxu0 0.0
  %367 = vmatpush1.msra.mxu0 0.0
  %368 = vmatprep.subr.mxu0 0.0
  %369 = vmatpush1.msra.mxu0 0.0
  %370 = vmatprep.subr.mxu0 0.0
  %371 = vmatpush1.msra.mxu0 0.0
  %372 = vmatprep.subr.mxu0 0.0
  %373 = vmatpush1.msra.mxu0 0.0
  %374 = vmatprep.subr.mxu0 0.0
  %375 = vmatpush1.msra.mxu0 0.0
  %376 = vmatprep.subr.mxu0 0.0
  %377 = vmatpush1.msra.mxu0 0.0
  %378 = vmatprep.subr.mxu0 0.0
  %379 = vmatpush1.msra.mxu0 0.0
  %380 = vmatprep.subr.mxu0 0.0
  %381 = vmatpush1.msra.mxu0 0.0
  %382 = vmatprep.subr.mxu0 0.0
  %383 = vmatpush1.msra.mxu0 0.0
  %384 = vmatprep.subr.mxu0 0.0
  %385 = vmatpush1.msra.mxu0 0.0
  %386 = vmatprep.subr.mxu0 0.0
  %387 = vmatpush1.msra.mxu0 0.0
  %388 = vmatprep.subr.mxu0 0.0
  %389 = vmatpush1.msra.mxu0 0.0
  %390 = vmatprep.subr.mxu0 0.0
  %391 = vmatpush1.msra.mxu0 0.0
  %392 = vmatprep.subr.mxu0 0.0
  %393 = vmatpush1.msra.mxu0 0.0
  %394 = vmatprep.subr.mxu0 0.0
  %395 = vmatpush1.msra.mxu0 0.0
  %396 = vmatprep.subr.mxu0 0.0
  %397 = vmatpush1.msra.mxu0 0.0
  %398 = vmatprep.subr.mxu0 0.0
  %399 = vmatpush1.msra.mxu0 0.0
  %400 = vmatprep.subr.mxu0 0.0
  %401 = vmatpush1.msra.mxu0 0.0
  %402 = vmatprep.subr.mxu0 0.0
  %403 = vmatpush1.msra.mxu0 0.0
  %404 = vmatprep.subr.mxu0 0.0
  %405 = vmatpush1.msra.mxu0 0.0
  %406 = vmatprep.subr.mxu0 0.0
  %407 = vmatpush1.msra.mxu0 0.0
  %408 = vmatprep.subr.mxu0 0.0
  %409 = vmatpush1.msra.mxu0 0.0
  %410 = vmatprep.subr.mxu0 0.0
  %411 = vmatpush1.msra.mxu0 0.0
  %412 = vmatprep.mubr.f32.mxu0 0.0
  %413 = vmatmul.mubr.f32.gmra.mrb[0].mxu0 %v343
  %v414 = vpop.f32.mrb[0].mxu0
  %v415 = vadd.f32 %v340, %v414
  %v416 = vpop.f32.mrb[0].mxu0
  %417 = vmatprep.mubr.f32.mxu0 0.0
  %418 = vmatmul.mubr.f32.gmra.mrb[0].mxu0 %v346
  %v419 = vpop.f32.mrb[0].mxu0
  %v420 = vadd.f32 %v340, %v419
  %v421 = vpop.f32.mrb[0].mxu0
  %422 = vdwg.mxu0
  %vm423 = vcmask 15360
  %424 = vst.msk [vmem:[%s9] sm:$0xff] %vm423, %v415
  %425 = vst.msk [vmem:[%s9 + $0x8] sm:$0xff] %vm423, %v420
  // Predicated region
  $region38: #{tpu_custom_call.1} parent=0 // pred_check
    _
  $region39: #{tpu_custom_call.1} parent=0 // pred_check_branch
    %427 = sbr.rel (0) target = $region41
  $region40: #{tpu_custom_call.1} parent=0 // pred_region
    _
  $region41: #{tpu_custom_call.1} parent=0 // pred_fallthru
    _
  // Predicated region
  $region42: #{tpu_custom_call.1} parent=0 // pred_check
    _
  $region43: #{tpu_custom_call.1} parent=0 // pred_check_branch
    %429 = sbr.rel (0) target = $region45
  $region44: #{tpu_custom_call.1} parent=0 // pred_region
    _
  $region45: #{tpu_custom_call.1} parent=0 // pred_fallthru
    _

</llo_original>
